<compile_context>
chip_gen: v7x
topology: tpu7x:2x2x1
jax: 0.10.0
libtpu: 0.0.40
codegen_flags: <defaults>
</compile_context>

<pallas_src>
import jax
import jax.numpy as jnp
from jax.experimental import pallas as pl
from jax.experimental.pallas import tpu as pltpu


def _round_up(x, m):
    return (x + m - 1) // m * m


def _cdiv(a, b):
    return (a + b - 1) // b


# ----------------------------- fused Pallas kernel ---------------------------
def _server_disc_kernel(x_ref, w1_ref, b1_ref, w2_ref, b2_ref, o_ref, f_ref):
    # Layer 1 on the MXU: bf16 x bf16 -> f32 accumulation.
    f = jnp.dot(x_ref[...], w1_ref[...], preferred_element_type=jnp.float32)
    f = f + b1_ref[...]
    f = jnp.maximum(f, 0.2 * f)                    # LeakyReLU(0.2)
    f_ref[...] = f.astype(jnp.bfloat16)            # bf16 features writeback
    # Dropout(0.5) is identity in eval mode.
    # Layer 2 (256 -> 1): f32 broadcast multiply + lane reduction (VPU + XLU).
    o = jnp.sum(f * w2_ref[...], axis=-1, keepdims=True)   # (tm, 1)
    o_ref[...] = o + b2_ref[...]


def server_discriminator_forward(params, h, *, tile_rows=2048):
    """h: (B, in_features) f32 -> (o: (B, 1) f32, features: (B, 256) bf16)."""
    B, in_f = h.shape
    in_pad = params["w1"].shape[0]                 # in_features rounded up to 128

    # Balanced row tiles; force >= 2 grid steps when B allows (keeps both v7x
    # TensorCores busy; v5e/v6e single-TC unaffected). Padding capped at tm-1 rows.
    n_tiles = max(_cdiv(B, tile_rows), 2 if B > 16 else 1)
    tm = _round_up(_cdiv(B, n_tiles), 16)          # bf16 sublane packing
    B_pad = _round_up(B, tm)
    grid = (B_pad // tm,)

    # One wrapper pass over x: cast, then a single fused pad (rows + lanes).
    x = h.astype(jnp.bfloat16)
    if B_pad != B or in_pad != in_f:
        x = jnp.pad(x, ((0, B_pad - B), (0, in_pad - in_f)))

    out_shape = (
        jax.ShapeDtypeStruct((B_pad, 1), jnp.float32),     # logits column
        jax.ShapeDtypeStruct((B_pad, 256), jnp.bfloat16),  # features (bf16)
    )
    grid_spec = pltpu.PrefetchScalarGridSpec(
        num_scalar_prefetch=0,
        grid=grid,
        in_specs=[
            pl.BlockSpec((tm, in_pad), lambda i: (i, 0)),   # x row tile
            pl.BlockSpec((in_pad, 256), lambda i: (0, 0)),  # W1 (resident, bf16)
            pl.BlockSpec((1, 256), lambda i: (0, 0)),       # b1 (resident, f32)
            pl.BlockSpec((1, 256), lambda i: (0, 0)),       # W2 row (resident, f32)
            pl.BlockSpec((1, 1), lambda i: (0, 0)),         # b2 (resident, f32)
        ],
        out_specs=[
            pl.BlockSpec((tm, 1), lambda i: (i, 0)),
            pl.BlockSpec((tm, 256), lambda i: (i, 0)),
        ],
    )
    flops = 2 * B_pad * in_pad * 256 + 2 * B_pad * 256
    bytes_accessed = (x.size * 2 + params["w1"].size * 2
                      + (params["b1"].size + params["w2"].size + params["b2"].size) * 4
                      + B_pad * 256 * 2 + B_pad * 4)

    o, feats = pl.pallas_call(
        _server_disc_kernel,
        out_shape=out_shape,
        grid_spec=grid_spec,
        compiler_params=pltpu.CompilerParams(
            dimension_semantics=("parallel",),      # megacore / v7x TC sharding
            vmem_limit_bytes=32 * 1024 * 1024,
        ),
        cost_estimate=pl.CostEstimate(
            flops=flops, transcendentals=0, bytes_accessed=bytes_accessed),
    )(x, params["w1"], params["b1"], params["w2"], params["b2"])

    # TODO(synk): features are returned in bf16 (HBM-traffic optimization);
    # upcast at the consumer if full f32 self.features precision is required.
    return o[:B], feats[:B]


# --------------------------- parameter setup (glue) ---------------------------
def _spectral_normalize(w_out_in, n_iter=30):
    """Divide a (out, in) weight by its largest singular value (power iter)."""
    w = w_out_in
    v = jnp.ones((w.shape[1],), jnp.float32) / jnp.sqrt(w.shape[1])
    u = w @ v
    for _ in range(n_iter):
        u = w @ v
        u = u / (jnp.linalg.norm(u) + 1e-12)
        v = w.T @ u
        v = v / (jnp.linalg.norm(v) + 1e-12)
    sigma = u @ (w @ v)
    return w / sigma


def _init_linear(key, in_f, out_f, scale=0.1):
    kw, kb = jax.random.split(key)
    w = scale * jax.random.normal(kw, (out_f, in_f), jnp.float32)   # torch (out, in)
    b = scale * jax.random.normal(kb, (out_f,), jnp.float32)
    # TODO(synk): spectral_norm's per-forward power-iteration update (train mode)
    # is baked into the weights here; matches eval-mode inference with converged sigma.
    w = _spectral_normalize(w)
    return w.T, b                                                    # (in, out)


def make_server_discriminator_params(key, in_features):
    k1, k2 = jax.random.split(key)
    w1, b1 = _init_linear(k1, in_features, 256)     # (in_f, 256), (256,)
    w2, b2 = _init_linear(k2, 256, 1)               # (256, 1),   (1,)

    in_pad = _round_up(in_features, 128)
    w1p = jnp.zeros((in_pad, 256), jnp.float32).at[:in_features, :].set(w1)

    params = {                                       # kernel-side (padded / cast)
        "w1": w1p.astype(jnp.bfloat16),              # (in_pad, 256) bf16
        "b1": b1.reshape(1, 256).astype(jnp.float32),
        "w2": w2.reshape(1, 256).astype(jnp.float32),  # row vector, f32
        "b2": b2.reshape(1, 1).astype(jnp.float32),
    }
    ref_params = {"w1": w1, "b1": b1, "w2": w2, "b2": b2}   # f32 reference
    return params, ref_params


# ------------------------------ pure-JAX reference ----------------------------
def _ref_forward(ref_params, h):
    f = h @ ref_params["w1"] + ref_params["b1"]
    f = jnp.where(f > 0, f, 0.2 * f)
    o = f @ ref_params["w2"] + ref_params["b2"]
    return o, f


# ------------------------------------- main ------------------------------------
if __name__ == "__main__":
    in_features = 48
    batch = 24

    key = jax.random.PRNGKey(0)
    k_p, k_h = jax.random.split(key)
    params, ref_params = make_server_discriminator_params(k_p, in_features)
    h = jax.random.normal(k_h, (batch, in_features), jnp.float32)

    # batch=24 -> 2 balanced 16-row tiles: exercises the multi-step (pipelined)
    # grid, row padding, and the lane-padded K dimension.
    fwd = jax.jit(server_discriminator_forward)
    o, feats = fwd(params, h)
    jax.block_until_ready(o)
    jax.block_until_ready(feats)

    o_ref, f_ref = _ref_forward(ref_params, h)
    assert o.shape == (batch, 1)
    assert feats.shape == (batch, 256)
    # bf16 MXU inputs + bf16 feature writeback with f32 accumulation ->
    # relaxed tolerances vs the pure-f32 reference.
    assert jnp.allclose(feats.astype(jnp.float32), f_ref, atol=3e-2, rtol=3e-2)
    assert jnp.allclose(o, o_ref, atol=3e-2, rtol=3e-2)

    # TODO(synk): nn.Dropout(0.5) is stochastic in train mode; implemented as
    # eval-mode identity here.
    print("KERNEL_OK")
</pallas_src>

<mosaic_0001>
module attributes {stable_mosaic.version = 11 : i64} {
  func.func @_server_disc_kernel(%arg0: i32, %arg1: memref<16x128xbf16, #tpu.memory_space<vmem>>, %arg2: memref<128x256xbf16, #tpu.memory_space<vmem>>, %arg3: memref<1x256xf32, #tpu.memory_space<vmem>>, %arg4: memref<1x256xf32, #tpu.memory_space<vmem>>, %arg5: memref<1x1xf32, #tpu.memory_space<vmem>>, %arg6: memref<16x1xf32, #tpu.memory_space<vmem>>, %arg7: memref<16x256xbf16, #tpu.memory_space<vmem>>) attributes {dimension_semantics = [#tpu.dimension_semantics<parallel>], iteration_bounds = array<i64: 2>, scalar_prefetch = 0 : i64, scratch_operands = 0 : i64, tpu.core_type = #tpu.core_type<tc>, window_params = [{transform_indices = @transform_0, window_bounds = array<i64: 16, 128>}, {pipeline_mode = #tpu.pipeline_mode<synchronous>, transform_indices = @transform_1, window_bounds = array<i64: 128, 256>}, {pipeline_mode = #tpu.pipeline_mode<synchronous>, transform_indices = @transform_2, window_bounds = array<i64: 1, 256>}, {pipeline_mode = #tpu.pipeline_mode<synchronous>, transform_indices = @transform_3, window_bounds = array<i64: 1, 256>}, {pipeline_mode = #tpu.pipeline_mode<synchronous>, transform_indices = @transform_4, window_bounds = array<i64: 1, 1>}, {transform_indices = @transform_5, window_bounds = array<i64: 16, 1>}, {transform_indices = @transform_6, window_bounds = array<i64: 16, 256>}]} {
    %c0 = arith.constant 0 : index
    %c0_0 = arith.constant 0 : index
    %0 = vector.load %arg1[%c0, %c0_0] : memref<16x128xbf16, #tpu.memory_space<vmem>>, vector<16x128xbf16>
    %c0_1 = arith.constant 0 : index
    %c0_2 = arith.constant 0 : index
    %1 = vector.load %arg2[%c0_1, %c0_2] : memref<128x256xbf16, #tpu.memory_space<vmem>>, vector<128x256xbf16>
    %cst = arith.constant dense<0.000000e+00> : vector<16x256xf32>
    %2 = tpu.matmul %0, %1, %cst {dimension_numbers = #tpu.dot_dimension_numbers<[1], [0], [0], [1], [0, 0, 1, 1], [], []>} : vector<16x128xbf16>, vector<128x256xbf16>, vector<16x256xf32> -> vector<16x256xf32>
    %c0_3 = arith.constant 0 : index
    %c0_4 = arith.constant 0 : index
    %3 = vector.load %arg3[%c0_3, %c0_4] : memref<1x256xf32, #tpu.memory_space<vmem>>, vector<1x256xf32>
    %4 = vector.broadcast %3 : vector<1x256xf32> to vector<16x256xf32>
    %5 = arith.addf %2, %4 : vector<16x256xf32>
    %cst_5 = arith.constant 2.000000e-01 : f32
    %6 = vector.broadcast %cst_5 : f32 to vector<16x256xf32>
    %7 = arith.mulf %6, %5 : vector<16x256xf32>
    %8 = arith.maximumf %5, %7 : vector<16x256xf32>
    %9 = arith.truncf %8 : vector<16x256xf32> to vector<16x256xbf16>
    %c0_6 = arith.constant 0 : index
    %c0_7 = arith.constant 0 : index
    %10 = vector.load %arg7[%c0_6, %c0_7] : memref<16x256xbf16, #tpu.memory_space<vmem>>, vector<16x256xbf16>
    tpu.vector_store %arg7[%c0_6, %c0_7], %9 {strides = array<i32>} : memref<16x256xbf16, #tpu.memory_space<vmem>>, vector<16x256xbf16>,
    %c0_8 = arith.constant 0 : index
    %c0_9 = arith.constant 0 : index
    %11 = vector.load %arg4[%c0_8, %c0_9] : memref<1x256xf32, #tpu.memory_space<vmem>>, vector<1x256xf32>
    %12 = vector.broadcast %11 : vector<1x256xf32> to vector<16x256xf32>
    %13 = arith.mulf %8, %12 : vector<16x256xf32>
    %cst_10 = arith.constant dense<0.000000e+00> : vector<16xf32>
    %14 = vector.multi_reduction <add>, %13, %cst_10 [1] : vector<16x256xf32> to vector<16xf32>
    %15 = vector.shape_cast %14 : vector<16xf32> to vector<16x1xf32>
    %c0_11 = arith.constant 0 : index
    %c0_12 = arith.constant 0 : index
    %16 = vector.load %arg5[%c0_11, %c0_12] : memref<1x1xf32, #tpu.memory_space<vmem>>, vector<1x1xf32>
    %17 = vector.broadcast %16 : vector<1x1xf32> to vector<16x1xf32>
    %18 = arith.addf %15, %17 : vector<16x1xf32>
    %c0_13 = arith.constant 0 : index
    %c0_14 = arith.constant 0 : index
    %19 = vector.load %arg6[%c0_13, %c0_14] : memref<16x1xf32, #tpu.memory_space<vmem>>, vector<16x1xf32>
    tpu.vector_store %arg6[%c0_13, %c0_14], %18 {strides = array<i32>} : memref<16x1xf32, #tpu.memory_space<vmem>>, vector<16x1xf32>,
    return
  }
  func.func @transform_0(%arg0: i32) -> (i32, i32) {
    %c0_i32 = arith.constant 0 : i32
    %c0_i32_0 = arith.constant 0 : i32
    return %arg0, %c0_i32 : i32, i32
  }
  func.func @transform_1(%arg0: i32) -> (i32, i32) {
    %c0_i32 = arith.constant 0 : i32
    %c0_i32_0 = arith.constant 0 : i32
    %c0_i32_1 = arith.constant 0 : i32
    return %c0_i32, %c0_i32_0 : i32, i32
  }
  func.func @transform_2(%arg0: i32) -> (i32, i32) {
    %c0_i32 = arith.constant 0 : i32
    %c0_i32_0 = arith.constant 0 : i32
    %c0_i32_1 = arith.constant 0 : i32
    return %c0_i32, %c0_i32_0 : i32, i32
  }
  func.func @transform_3(%arg0: i32) -> (i32, i32) {
    %c0_i32 = arith.constant 0 : i32
    %c0_i32_0 = arith.constant 0 : i32
    %c0_i32_1 = arith.constant 0 : i32
    return %c0_i32, %c0_i32_0 : i32, i32
  }
  func.func @transform_4(%arg0: i32) -> (i32, i32) {
    %c0_i32 = arith.constant 0 : i32
    %c0_i32_0 = arith.constant 0 : i32
    %c0_i32_1 = arith.constant 0 : i32
    return %c0_i32, %c0_i32_0 : i32, i32
  }
  func.func @transform_5(%arg0: i32) -> (i32, i32) {
    %c0_i32 = arith.constant 0 : i32
    %c0_i32_0 = arith.constant 0 : i32
    return %arg0, %c0_i32 : i32, i32
  }
  func.func @transform_6(%arg0: i32) -> (i32, i32) {
    %c0_i32 = arith.constant 0 : i32
    %c0_i32_0 = arith.constant 0 : i32
    return %arg0, %c0_i32 : i32, i32
  }
}

</mosaic_0001>

<llo_original>
// kernel: server_discriminator_forward.1
$region0: #{server_discriminator_forward.1}
  #allocation0 [shape = 'u32[]', space=smem, size = 0x4, offset = 0x4, fixed_abs, tag = 'smem constant byte address 0x4 - core index']
  #allocation1 [shape = 'u32[144,128]{1,0:T(1,128)}', space=vmem, size = 0x12000, scoped, tag = 'internal scratch']
  #allocation2 [shape = 'f32[1,1]{1,0:T(1,128)S(1)}', space=vmem, size = 0x200, scoped, tag = 'scoped memory for server_discriminator_forward.1']
  %s0 = inlined_call_operand.vmem [shape: bf16[32,128], index: 0, kind: input, shape index: {}]
  %s1 = inlined_call_operand.hbm [shape: bf16[128,256], index: 1, kind: input, shape index: {}]
  %s2 = inlined_call_operand.vmem [shape: f32[1,256], index: 2, kind: input, shape index: {}]
  %s3 = inlined_call_operand.vmem [shape: f32[1,256], index: 3, kind: input, shape index: {}]
  %s4 = inlined_call_operand.<no memory space> [shape: f32[1,1], index: 4, kind: input, shape index: {}]
  %s5 = inlined_call_operand.vmem [shape: f32[32,1], index: 5, kind: output, shape index: {0}]
  %s6 = inlined_call_operand.vmem [shape: bf16[32,256], index: 6, kind: output, shape index: {1}]
  %7 = xla_tuple %s5, %s6
  %s8 = sld [smem:[#allocation0]]
  $region65: #{server_discriminator_forward.1} parent=0
    _
  %s10 = ssub.s32 1, %s8
  %s11 = scalar_select 0, %s10, %s8
  %v12 = vstv %s4
  %13 = vst [vmem:[#allocation2] sm:$0x1] %v12
  $region1: #{server_discriminator_forward.1} parent=0
    #allocation3 [shape = 'u8[65536]{0}', space=vmem, size = 0x10000, scoped, tag = 'input window, operand 1, single buffered']
    #allocation4 [shape = 's32[2]{0}', space=sflag, size = 0x8, scoped, tag = 'scoped memory for server_discriminator_forward.1']
    %14 = vsyncpa [#allocation4], 0
    loop: start=0, step=1, limit=4
    $region2: #{server_discriminator_forward.1} parent=1 // loop_pre_header
      _
    $region3: #{server_discriminator_forward.1} parent=1 // loop_header
      %s16 = sphi 0, %s20
      %p17 = scmp.ge.s32.totalorder %s16, 4
      %s26 = sphi 0, %s28
      %s29 = sphi 0, %s26
      %s30 = sphi 0, %s29
      %s46 = sphi 0, %s30
      %s50 = sphi 0, %s50
      %s52 = sphi 0, %s50
      %s53 = sphi 0, %s52
      %s67 = sphi 0, %s53
      %s71 = sphi 0, %s71
      %s73 = sphi 0, %s71
      %s74 = sphi 0, %s73
      %s88 = sphi 0, %s74
      %s92 = sphi 0, %s92
      %s94 = sphi 0, %s92
      %s95 = sphi 0, %s94
      %s109 = sphi 0, %s95
      %s113 = sphi 0, %s113
      %s115 = sphi 0, %s113
      %s116 = sphi 0, %s115
      %s130 = sphi 0, %s116
      %s136 = sphi 0, %s138
      %s139 = sphi 0, %s136
      %s140 = sphi 0, %s139
      %s156 = sphi 0, %s140
      %s162 = sphi 0, %s164
      %s165 = sphi 0, %s162
      %s166 = sphi 0, %s165
      %s182 = sphi 0, %s166
    $region4: #{server_discriminator_forward.1} parent=1 // loop_header_branch
      %19 = sbr.rel (%p17) target = $region8
    $region5: #{server_discriminator_forward.1} parent=1 // loop_body
      %s21 = ssub.s32 %s16, 1
      %s22 = ssub.s32 %s16, 2
      %s23 = sadd.s32 %s16, 1
      %s24 = ssub.s32 %s16, %s23
      %p25 = scmp.eq.s32.totalorder %s24, 0
      %s27 = sadd.s32 %s26, 1
      %s28 = scalar_select %p25, %s26, %s27
      %p31 = pneg %p25
      %p32 = scmp.eq.s32.totalorder %s16, 1
      %p33 = por %p31, %p32
      %p34 = scmp.ne.s32.totalorder %s26, %s29
      %p35 = scmp.eq.s32.totalorder %s16, 0
      %p36 = por %p34, %p35
      %p37 = scmp.ne.s32.totalorder %s26, %s29
      %p38 = scmp.eq.s32.totalorder %s21, 1
      %p39 = por %p37, %p38
      %p40 = scmp.ne.s32.totalorder %s29, %s30
      %p41 = scmp.eq.s32.totalorder %s21, 0
      %p42 = por %p40, %p41
      %p43 = scmp.ne.s32.totalorder %s29, %s30
      %p44 = scmp.eq.s32.totalorder %s22, 1
      %p45 = por %p43, %p44
      %p47 = scmp.ne.s32.totalorder %s30, %s46
      %p48 = scmp.eq.s32.totalorder %s22, 0
      %p49 = por %p47, %p48
      %s51 = sadd.s32 %s50, 1
      %p54 = scmp.eq.s32.totalorder %s16, 1
      %p55 = scmp.ne.s32.totalorder %s50, %s52
      %p56 = scmp.eq.s32.totalorder %s16, 0
      %p57 = por %p55, %p56
      %p58 = scmp.ne.s32.totalorder %s50, %s52
      %p59 = scmp.eq.s32.totalorder %s21, 1
      %p60 = por %p58, %p59
      %p61 = scmp.ne.s32.totalorder %s52, %s53
      %p62 = scmp.eq.s32.totalorder %s21, 0
      %p63 = por %p61, %p62
      %p64 = scmp.ne.s32.totalorder %s52, %s53
      %p65 = scmp.eq.s32.totalorder %s22, 1
      %p66 = por %p64, %p65
      %p68 = scmp.ne.s32.totalorder %s53, %s67
      %p69 = scmp.eq.s32.totalorder %s22, 0
      %p70 = por %p68, %p69
      %s72 = sadd.s32 %s71, 1
      %p75 = scmp.eq.s32.totalorder %s16, 1
      %p76 = scmp.ne.s32.totalorder %s71, %s73
      %p77 = scmp.eq.s32.totalorder %s16, 0
      %p78 = por %p76, %p77
      %p79 = scmp.ne.s32.totalorder %s71, %s73
      %p80 = scmp.eq.s32.totalorder %s21, 1
      %p81 = por %p79, %p80
      %p82 = scmp.ne.s32.totalorder %s73, %s74
      %p83 = scmp.eq.s32.totalorder %s21, 0
      %p84 = por %p82, %p83
      %p85 = scmp.ne.s32.totalorder %s73, %s74
      %p86 = scmp.eq.s32.totalorder %s22, 1
      %p87 = por %p85, %p86
      %p89 = scmp.ne.s32.totalorder %s74, %s88
      %p90 = scmp.eq.s32.totalorder %s22, 0
      %p91 = por %p89, %p90
      %s93 = sadd.s32 %s92, 1
      %p96 = scmp.eq.s32.totalorder %s16, 1
      %p97 = scmp.ne.s32.totalorder %s92, %s94
      %p98 = scmp.eq.s32.totalorder %s16, 0
      %p99 = por %p97, %p98
      %p100 = scmp.ne.s32.totalorder %s92, %s94
      %p101 = scmp.eq.s32.totalorder %s21, 1
      %p102 = por %p100, %p101
      %p103 = scmp.ne.s32.totalorder %s94, %s95
      %p104 = scmp.eq.s32.totalorder %s21, 0
      %p105 = por %p103, %p104
      %p106 = scmp.ne.s32.totalorder %s94, %s95
      %p107 = scmp.eq.s32.totalorder %s22, 1
      %p108 = por %p106, %p107
      %p110 = scmp.ne.s32.totalorder %s95, %s109
      %p111 = scmp.eq.s32.totalorder %s22, 0
      %p112 = por %p110, %p111
      %s114 = sadd.s32 %s113, 1
      %p117 = scmp.eq.s32.totalorder %s16, 1
      %p118 = scmp.ne.s32.totalorder %s113, %s115
      %p119 = scmp.eq.s32.totalorder %s16, 0
      %p120 = por %p118, %p119
      %p121 = scmp.ne.s32.totalorder %s113, %s115
      %p122 = scmp.eq.s32.totalorder %s21, 1
      %p123 = por %p121, %p122
      %p124 = scmp.ne.s32.totalorder %s115, %s116
      %p125 = scmp.eq.s32.totalorder %s21, 0
      %p126 = por %p124, %p125
      %p127 = scmp.ne.s32.totalorder %s115, %s116
      %p128 = scmp.eq.s32.totalorder %s22, 1
      %p129 = por %p127, %p128
      %p131 = scmp.ne.s32.totalorder %s116, %s130
      %p132 = scmp.eq.s32.totalorder %s22, 0
      %p133 = por %p131, %p132
      %s134 = ssub.s32 %s16, %s23
      %p135 = scmp.eq.s32.totalorder %s134, 0
      %s137 = sadd.s32 %s136, 1
      %s138 = scalar_select %p135, %s136, %s137
      %p141 = pneg %p135
      %p142 = scmp.eq.s32.totalorder %s16, 1
      %p143 = por %p141, %p142
      %p144 = scmp.ne.s32.totalorder %s136, %s139
      %p145 = scmp.eq.s32.totalorder %s16, 0
      %p146 = por %p144, %p145
      %p147 = scmp.ne.s32.totalorder %s136, %s139
      %p148 = scmp.eq.s32.totalorder %s21, 1
      %p149 = por %p147, %p148
      %p150 = scmp.ne.s32.totalorder %s139, %s140
      %p151 = scmp.eq.s32.totalorder %s21, 0
      %p152 = por %p150, %p151
      %p153 = scmp.ne.s32.totalorder %s139, %s140
      %p154 = scmp.eq.s32.totalorder %s22, 1
      %p155 = por %p153, %p154
      %p157 = scmp.ne.s32.totalorder %s140, %s156
      %p158 = scmp.eq.s32.totalorder %s22, 0
      %p159 = por %p157, %p158
      %s160 = ssub.s32 %s16, %s23
      %p161 = scmp.eq.s32.totalorder %s160, 0
      %s163 = sadd.s32 %s162, 1
      %s164 = scalar_select %p161, %s162, %s163
      %p167 = pneg %p161
      %p168 = scmp.eq.s32.totalorder %s16, 1
      %p169 = por %p167, %p168
      %p170 = scmp.ne.s32.totalorder %s162, %s165
      %p171 = scmp.eq.s32.totalorder %s16, 0
      %p172 = por %p170, %p171
      %p173 = scmp.ne.s32.totalorder %s162, %s165
      %p174 = scmp.eq.s32.totalorder %s21, 1
      %p175 = por %p173, %p174
      %p176 = scmp.ne.s32.totalorder %s165, %s166
      %p177 = scmp.eq.s32.totalorder %s21, 0
      %p178 = por %p176, %p177
      %p179 = scmp.ne.s32.totalorder %s165, %s166
      %p180 = scmp.eq.s32.totalorder %s22, 1
      %p181 = por %p179, %p180
      %p183 = scmp.ne.s32.totalorder %s166, %s182
      %p184 = scmp.eq.s32.totalorder %s22, 0
      %p185 = por %p183, %p184
      %p186 = scmp.le.s32.totalorder 1, %s16
      %p187 = scmp.lt.s32.totalorder %s16, 3
      %p188 = pnand %p186, %p187
      %p189 = pneg %p188
      // Predicated region
      $region9: #{server_discriminator_forward.1} parent=5 // pred_check
        _
      $region10: #{server_discriminator_forward.1} parent=5 // pred_check_branch
        %191 = sbr.rel (%p188) target = $region12
      $region11: #{server_discriminator_forward.1} parent=5 // pred_region
        %s192 = ssub.s32 %s16, 1
        // Predicated region
        $region13: #{server_discriminator_forward.1} parent=11 // pred_check
          %p193 = pneg %p63
        $region14: #{server_discriminator_forward.1} parent=11 // pred_check_branch
          %195 = sbr.rel (%p193) target = $region16
        $region15: #{server_discriminator_forward.1} parent=11 // pred_region
          %s197 = ssub.s32 2048, 2048
          %198 = vsyncadd [#allocation4], %s197
          %s199 = sshll.u32 [#allocation3], 4
          %s200 = int_to_ptr.vmem [resolvable:$true] %s199
          %205 = dma.hbm_to_vmem [thread:$0]  %s1, 2048, %s200, [#allocation4], 128, 128, 8
        $region16: #{server_discriminator_forward.1} parent=11 // pred_fallthru
          _
        // Predicated region
        $region17: #{server_discriminator_forward.1} parent=11 // pred_check
          %p206 = pneg %p84
        $region18: #{server_discriminator_forward.1} parent=11 // pred_check_branch
          %208 = sbr.rel (%p206) target = $region20
        $region19: #{server_discriminator_forward.1} parent=11 // pred_region
          _
        $region20: #{server_discriminator_forward.1} parent=11 // pred_fallthru
          _
        // Predicated region
        $region21: #{server_discriminator_forward.1} parent=11 // pred_check
          %p209 = pneg %p105
        $region22: #{server_discriminator_forward.1} parent=11 // pred_check_branch
          %211 = sbr.rel (%p209) target = $region24
        $region23: #{server_discriminator_forward.1} parent=11 // pred_region
          _
        $region24: #{server_discriminator_forward.1} parent=11 // pred_fallthru
          _
        // Predicated region
        $region25: #{server_discriminator_forward.1} parent=11 // pred_check
          %p212 = pneg %p126
        $region26: #{server_discriminator_forward.1} parent=11 // pred_check_branch
          %214 = sbr.rel (%p212) target = $region28
        $region27: #{server_discriminator_forward.1} parent=11 // pred_region
          _
        $region28: #{server_discriminator_forward.1} parent=11 // pred_fallthru
          _
      $region12: #{server_discriminator_forward.1} parent=5 // pred_fallthru
        _
      %p215 = scmp.lt.s32.totalorder %s16, 2
      // Predicated region
      $region29: #{server_discriminator_forward.1} parent=5 // pred_check
        %p216 = pneg %p215
      $region30: #{server_discriminator_forward.1} parent=5 // pred_check_branch
        %218 = sbr.rel (%p216) target = $region32
      $region31: #{server_discriminator_forward.1} parent=5 // pred_region
        // Predicated region
        $region33: #{server_discriminator_forward.1} parent=31 // pred_check
          %p219 = pneg %p36
        $region34: #{server_discriminator_forward.1} parent=31 // pred_check_branch
          %221 = sbr.rel (%p219) target = $region36
        $region35: #{server_discriminator_forward.1} parent=31 // pred_region
          %s222 = smul.u32 2, %s16
          %p223 = scmp.lt.s32.totalorder %s222, 3
          %s224 = scalar_select %p223, %s222, 3
          %s225 = smul.addr %s224, 4
          %s226 = scalar_lea.vmem %s0, %s225
          %s227 = smul.u32 2, %s16
        $region36: #{server_discriminator_forward.1} parent=31 // pred_fallthru
          _
      $region32: #{server_discriminator_forward.1} parent=5 // pred_fallthru
        _
      %p228 = scmp.le.s32.totalorder 1, %s16
      %p229 = scmp.lt.s32.totalorder %s16, 3
      %p230 = pnand %p228, %p229
      %p231 = pneg %p230
      // Predicated region
      $region37: #{server_discriminator_forward.1} parent=5 // pred_check
        _
      $region38: #{server_discriminator_forward.1} parent=5 // pred_check_branch
        %233 = sbr.rel (%p230) target = $region40
      $region39: #{server_discriminator_forward.1} parent=5 // pred_region
        %s234 = ssub.s32 %s16, 1
        // Predicated region
        $region41: #{server_discriminator_forward.1} parent=39 // pred_check
          %p235 = pneg %p63
        $region42: #{server_discriminator_forward.1} parent=39 // pred_check_branch
          %237 = sbr.rel (%p235) target = $region44
        $region43: #{server_discriminator_forward.1} parent=39 // pred_region
          %238 = dma.done [#allocation4], 2048
        $region44: #{server_discriminator_forward.1} parent=39 // pred_fallthru
          _
        %s239 = smul.u32 2, %s21
        %p240 = scmp.lt.s32.totalorder %s239, 3
        %s241 = scalar_select %p240, %s239, 3
        %s242 = smul.addr %s241, 4
        %s243 = scalar_lea.vmem %s0, %s242
        %p244 = pneg %p42
        %p245 = pneg %p39
        %p246 = pneg %p63
        %p247 = pneg %p60
        %p248 = pneg %p84
        %p249 = pneg %p81
        %p250 = pneg %p105
        %p251 = pneg %p102
        %p252 = pneg %p126
        %p253 = pneg %p123
        %p254 = pneg %p152
        %p255 = pneg %p149
        %s256 = smul.u32 2, %s21
        %p257 = scmp.lt.s32.totalorder %s256, 3
        %s258 = scalar_select %p257, %s256, 3
        %s259 = smul.addr %s258, 8
        %s260 = scalar_lea.vmem %s5, %s259
        %p261 = pneg %p178
        %p262 = pneg %p175
        %s263 = smul.u32 2, %s21
        %p264 = scmp.lt.s32.totalorder %s263, 3
        %s265 = scalar_select %p264, %s263, 3
        %s266 = smul.addr %s265, 2
        %s267 = smul.addr %s266, 4
        %s268 = scalar_lea.vmem %s6, %s267
        %s269 = smul.u32 2, %s21
        %p270 = scmp.lt.s32.totalorder %s269, 3
        %s271 = scalar_select %p270, %s269, 3
        %s272 = smul.addr %s271, 4
        %s273 = scalar_lea.vmem %s0, %s272
        %s274 = smul.u32 2, %s21
        %s275 = smul.u32 2, %s21
        %p276 = scmp.lt.s32.totalorder %s275, 3
        %s277 = scalar_select %p276, %s275, 3
        %s278 = smul.addr %s277, 8
        %s279 = scalar_lea.vmem %s5, %s278
        %s280 = smul.u32 2, %s21
        %s281 = smul.u32 2, %s21
        %p282 = scmp.lt.s32.totalorder %s281, 3
        %s283 = scalar_select %p282, %s281, 3
        %s284 = smul.addr %s283, 2
        %s285 = smul.addr %s284, 4
        %s286 = scalar_lea.vmem %s6, %s285
        %s287 = smul.u32 2, %s21
        %v289 = vld [vmem:[%s273] sm:$0xf]
        %v290 = vld [vmem:[%s273 + $0x4] sm:$0xf]
        %v291 = vld [vmem:[#allocation3] sm:$0xff]
        %v292 = vld [vmem:[#allocation3 + $0x8] sm:$0xff]
        %v293 = vld [vmem:[#allocation3 + $0x10] sm:$0xff]
        %v294 = vld [vmem:[#allocation3 + $0x18] sm:$0xff]
        %v295 = vld [vmem:[#allocation3 + $0x20] sm:$0xff]
        %v296 = vld [vmem:[#allocation3 + $0x28] sm:$0xff]
        %v297 = vld [vmem:[#allocation3 + $0x30] sm:$0xff]
        %v298 = vld [vmem:[#allocation3 + $0x38] sm:$0xff]
        %v299 = vld [vmem:[#allocation3 + $0x40] sm:$0xff]
        %v300 = vld [vmem:[#allocation3 + $0x48] sm:$0xff]
        %v301 = vld [vmem:[#allocation3 + $0x50] sm:$0xff]
        %v302 = vld [vmem:[#allocation3 + $0x58] sm:$0xff]
        %v303 = vld [vmem:[#allocation3 + $0x60] sm:$0xff]
        %v304 = vld [vmem:[#allocation3 + $0x68] sm:$0xff]
        %v305 = vld [vmem:[#allocation3 + $0x70] sm:$0xff]
        %v306 = vld [vmem:[#allocation3 + $0x78] sm:$0xff]
        %v307 = vld [vmem:[%s2] sm:$0x3]
        %v309 = vlaneseq
        %v310 = vshrl.u32 %v309, 7
        %v311 = vsub.s32 0, %v310
        %v312 = vrot.slane %v307, %v311
        %v313 = vlaneseq
        %v314 = vshrl.u32 %v313, 7
        %v315 = vsub.s32 1, %v314
        %v316 = vrot.slane %v307, %v315
        %v321 = vunpack.c.l.b16 %v289
        %v322 = vunpack.c.l.b16 %v290
        %v323 = vpack.c.b16 %v322, %v321
        %v341 = vunpack.c.l.b16 %v291
        %v342 = vunpack.c.h.b16 %v291
        %v343 = vunpack.c.l.b16 %v292
        %v344 = vunpack.c.h.b16 %v292
        %v345 = vunpack.c.l.b16 %v293
        %v346 = vunpack.c.h.b16 %v293
        %v347 = vunpack.c.l.b16 %v294
        %v348 = vunpack.c.h.b16 %v294
        %v349 = vunpack.c.l.b16 %v295
        %v350 = vunpack.c.h.b16 %v295
        %v351 = vunpack.c.l.b16 %v296
        %v352 = vunpack.c.h.b16 %v296
        %v353 = vunpack.c.l.b16 %v297
        %v354 = vunpack.c.h.b16 %v297
        %v355 = vunpack.c.l.b16 %v298
        %v356 = vunpack.c.h.b16 %v298
        %v357 = vunpack.c.l.b16 %v299
        %v358 = vunpack.c.h.b16 %v299
        %v359 = vunpack.c.l.b16 %v300
        %v360 = vunpack.c.h.b16 %v300
        %v361 = vunpack.c.l.b16 %v301
        %v362 = vunpack.c.h.b16 %v301
        %v363 = vunpack.c.l.b16 %v302
        %v364 = vunpack.c.h.b16 %v302
        %v365 = vunpack.c.l.b16 %v303
        %v366 = vunpack.c.h.b16 %v303
        %v367 = vunpack.c.l.b16 %v304
        %v368 = vunpack.c.h.b16 %v304
        %v369 = vunpack.c.l.b16 %v305
        %v370 = vunpack.c.h.b16 %v305
        %v371 = vunpack.c.l.b16 %v306
        %v372 = vunpack.c.h.b16 %v306
        %v373 = vpack.c.b16 %v343, %v341
        %v374 = vpack.c.b16 %v344, %v342
        %v375 = vpack.c.b16 %v347, %v345
        %v376 = vpack.c.b16 %v348, %v346
        %v377 = vpack.c.b16 %v351, %v349
        %v378 = vpack.c.b16 %v352, %v350
        %v379 = vpack.c.b16 %v355, %v353
        %v380 = vpack.c.b16 %v356, %v354
        %v381 = vpack.c.b16 %v359, %v357
        %v382 = vpack.c.b16 %v360, %v358
        %v383 = vpack.c.b16 %v363, %v361
        %v384 = vpack.c.b16 %v364, %v362
        %v385 = vpack.c.b16 %v367, %v365
        %v386 = vpack.c.b16 %v368, %v366
        %v387 = vpack.c.b16 %v371, %v369
        %v388 = vpack.c.b16 %v372, %v370
        %405 = vmatprep.subr.bf16.mxu0 %v374
        %406 = vmatpush1.bf16.msra.mxu0 %v373
        %407 = vmatprep.subr.bf16.mxu0 %v376
        %408 = vmatpush1.bf16.msra.mxu0 %v375
        %409 = vmatprep.subr.bf16.mxu0 %v378
        %410 = vmatpush1.bf16.msra.mxu0 %v377
        %411 = vmatprep.subr.bf16.mxu0 %v380
        %412 = vmatpush1.bf16.msra.mxu0 %v379
        %413 = vmatprep.subr.bf16.mxu0 %v382
        %414 = vmatpush1.bf16.msra.mxu0 %v381
        %415 = vmatprep.subr.bf16.mxu0 %v384
        %416 = vmatpush1.bf16.msra.mxu0 %v383
        %417 = vmatprep.subr.bf16.mxu0 %v386
        %418 = vmatpush1.bf16.msra.mxu0 %v385
        %419 = vmatprep.subr.bf16.mxu0 %v388
        %420 = vmatpush1.bf16.msra.mxu0 %v387
        %421 = vmatprep.subr.bf16.mxu0 0
        %422 = vmatpush1.bf16.msra.mxu0 0
        %423 = vmatprep.subr.bf16.mxu0 0
        %424 = vmatpush1.bf16.msra.mxu0 0
        %425 = vmatprep.subr.bf16.mxu0 0
        %426 = vmatpush1.bf16.msra.mxu0 0
        %427 = vmatprep.subr.bf16.mxu0 0
        %428 = vmatpush1.bf16.msra.mxu0 0
        %429 = vmatprep.subr.bf16.mxu0 0
        %430 = vmatpush1.bf16.msra.mxu0 0
        %431 = vmatprep.subr.bf16.mxu0 0
        %432 = vmatpush1.bf16.msra.mxu0 0
        %433 = vmatprep.subr.bf16.mxu0 0
        %434 = vmatpush1.bf16.msra.mxu0 0
        %435 = vmatprep.subr.bf16.mxu0 0
        %436 = vmatpush1.bf16.msra.mxu0 0
        %437 = vmatprep.mubr.bf16.mxu0 0
        %438 = vmatmul.mubr.bf16.gmra.mrb[0].mxu0 %v323
        %v439 = vpop.f32.mrb[0].mxu0
        %v440 = vadd.f32 %v312, %v439
        %v441 = vpop.f32.mrb[0].mxu0
        %v442 = vadd.f32 %v316, %v441
        %v443 = vpop.f32.mrb[0].mxu0
        %v444 = vadd.f32 %v312, %v443
        %v445 = vpop.f32.mrb[0].mxu0
        %v446 = vadd.f32 %v316, %v445
        %447 = vdwg.mxu0
        %v448 = vmul.f32 %v440, 0.2
        %v449 = vmul.f32 %v442, 0.2
        %v450 = vmul.f32 %v444, 0.2
        %v451 = vmul.f32 %v446, 0.2
        %v452 = vmax.f32 %v440, %v448
        %v453 = vmax.f32 %v442, %v449
        %v454 = vmax.f32 %v444, %v450
        %v455 = vmax.f32 %v446, %v451
        %v456 = vpack.c.bf16 %v454, %v452
        %v457 = vpack.c.bf16 %v455, %v453
        %v460 = vunpack.c.l.b16 %v456
        %v461 = vunpack.c.l.b16 %v457
        %v462 = vunpack.c.h.b16 %v456
        %v463 = vunpack.c.h.b16 %v457
        %v464 = vpack.c.b16 %v461, %v460
        %v465 = vpack.c.b16 %v463, %v462
        %468 = vst [vmem:[%s286] sm:$0xff] %v464
        %469 = vst [vmem:[%s286 + $0x8] sm:$0xff] %v465
        %v470 = vld [vmem:[%s3] sm:$0x3]
        %v472 = vlaneseq
        %v473 = vshrl.u32 %v472, 7
        %v474 = vsub.s32 0, %v473
        %v475 = vrot.slane %v470, %v474
        %v476 = vlaneseq
        %v477 = vshrl.u32 %v476, 7
        %v478 = vsub.s32 1, %v477
        %v479 = vrot.slane %v470, %v478
        %v482 = vmul.f32 %v452, %v475
        %v483 = vmul.f32 %v453, %v479
        %v484 = vmul.f32 %v454, %v475
        %v485 = vmul.f32 %v455, %v479
        %v486 = vadd.f32 %v482, %v483
        %487 = vadd.xlane.f32.xlu0 %v486
        %v488 = vpop.xlane.xlu0 %487
        %v489 = vadd.f32 %v484, %v485
        %490 = vadd.xlane.f32.xlu0 %v489
        %v491 = vpop.xlane.xlu0 %490
        %v492 = vld [vmem:[#allocation2] sm:$0x1]
        %v494 = vlaneseq
        %v495 = vshrl.u32 %v494, 7
        %v496 = vsub.s32 0, %v495
        %v497 = vrot.slane %v492, %v496
        %v499 = vadd.f32 %v488, %v497
        %v500 = vadd.f32 %v491, %v497
        %vm501 = vcmask 7168
        %502 = vst.msk [vmem:[%s279] sm:$0xff] %vm501, %v499
        %503 = vst.msk [vmem:[%s279 + $0x8] sm:$0xff] %vm501, %v500
        %s504 = smul.u32 2, %s21
        %p505 = scmp.lt.s32.totalorder %s504, 3
        %s506 = scalar_select %p505, %s504, 3
        %s507 = smul.addr %s506, 8
        %s508 = scalar_lea.vmem %s5, %s507
        %s509 = smul.u32 2, %s21
        %p510 = scmp.lt.s32.totalorder %s509, 3
        %s511 = scalar_select %p510, %s509, 3
        %s512 = smul.addr %s511, 2
        %s513 = smul.addr %s512, 4
        %s514 = scalar_lea.vmem %s6, %s513
        // Predicated region
        $region45: #{server_discriminator_forward.1} parent=39 // pred_check
          %p515 = pneg %p149
        $region46: #{server_discriminator_forward.1} parent=39 // pred_check_branch
          %517 = sbr.rel (%p515) target = $region48
        $region47: #{server_discriminator_forward.1} parent=39 // pred_region
          %s518 = smul.u32 2, %s21
        $region48: #{server_discriminator_forward.1} parent=39 // pred_fallthru
          _
        // Predicated region
        $region49: #{server_discriminator_forward.1} parent=39 // pred_check
          %p519 = pneg %p175
        $region50: #{server_discriminator_forward.1} parent=39 // pred_check_branch
          %521 = sbr.rel (%p519) target = $region52
        $region51: #{server_discriminator_forward.1} parent=39 // pred_region
          %s522 = smul.u32 2, %s21
        $region52: #{server_discriminator_forward.1} parent=39 // pred_fallthru
          _
      $region40: #{server_discriminator_forward.1} parent=5 // pred_fallthru
        _
      %p523 = scmp.le.s32.totalorder 2, %s16
      // Predicated region
      $region53: #{server_discriminator_forward.1} parent=5 // pred_check
        %p524 = pneg %p523
      $region54: #{server_discriminator_forward.1} parent=5 // pred_check_branch
        %526 = sbr.rel (%p524) target = $region56
      $region55: #{server_discriminator_forward.1} parent=5 // pred_region
        %s527 = ssub.s32 %s16, 2
        // Predicated region
        $region57: #{server_discriminator_forward.1} parent=55 // pred_check
          %p528 = pneg %p155
        $region58: #{server_discriminator_forward.1} parent=55 // pred_check_branch
          %530 = sbr.rel (%p528) target = $region60
        $region59: #{server_discriminator_forward.1} parent=55 // pred_region
          %s531 = smul.u32 2, %s22
          %p532 = scmp.lt.s32.totalorder %s531, 3
          %s533 = scalar_select %p532, %s531, 3
          %s534 = smul.addr %s533, 8
          %s535 = scalar_lea.vmem %s5, %s534
        $region60: #{server_discriminator_forward.1} parent=55 // pred_fallthru
          _
        // Predicated region
        $region61: #{server_discriminator_forward.1} parent=55 // pred_check
          %p536 = pneg %p181
        $region62: #{server_discriminator_forward.1} parent=55 // pred_check_branch
          %538 = sbr.rel (%p536) target = $region64
        $region63: #{server_discriminator_forward.1} parent=55 // pred_region
          %s539 = smul.u32 2, %s22
          %p540 = scmp.lt.s32.totalorder %s539, 3
          %s541 = scalar_select %p540, %s539, 3
          %s542 = smul.addr %s541, 2
          %s543 = smul.addr %s542, 4
          %s544 = scalar_lea.vmem %s6, %s543
        $region64: #{server_discriminator_forward.1} parent=55 // pred_fallthru
          _
      $region56: #{server_discriminator_forward.1} parent=5 // pred_fallthru
        _
    $region6: #{server_discriminator_forward.1} parent=1 // loop_footer
      %s20 = sadd.s32 1, %s16
    $region7: #{server_discriminator_forward.1} parent=1 // loop_footer_branch
      %15 = sbr.rel target = $region3
    $region8: #{server_discriminator_forward.1} parent=1 // loop_exit
      _
    %545 = vsyncpa [#allocation4], 1
    %s546 = scalar_lea.sflag [#allocation4], 1
    %547 = vsyncpa %s546, 1

</llo_original>
